<compile_context>
chip_gen: v5e
topology: v5e:2x2
jax: 0.10.0
libtpu: 0.0.40
codegen_flags: <defaults>
</compile_context>

<pallas_src>
import functools

import jax
import jax.numpy as jnp
from jax.experimental import pallas as pl
from jax.experimental.pallas import tpu as pltpu


def _round_up(x, m):
    return ((x + m - 1) // m) * m


# ----------------------------- Pallas kernel -------------------------------

def _fused_mlp_kernel(*refs, level_specs):
    """Whole-network forward for one batch tile, entirely in VMEM/vregs.

    refs = (x_ref, w0, b0, w1, b1, ..., o_ref). level_specs is a static tuple
    of (chunk_meta, relu) with chunk_meta = ((in_start, in_size), ...).
    Each level computes  h_next = concat_chunks( h[:, s:s+k] @ W + b ), opt ReLU.
    BN is already folded into W/b; W may be bf16 (MXU operands only), while the
    bias add / ReLU / accumulate stay f32 (v5e has no bf16 VPU).
    """
    x_ref = refs[0]
    o_ref = refs[-1]
    h = x_ref[...]
    r = 1
    for chunk_meta, relu in level_specs:
        outs = []
        for (in_start, in_size) in chunk_meta:
            w = refs[r][...]
            b = refs[r + 1][...]
            r += 2
            if in_start == 0 and in_size == h.shape[1]:
                hi = h
            else:
                hi = h[:, in_start:in_start + in_size]
            outs.append(
                jnp.dot(hi.astype(w.dtype), w,
                        preferred_element_type=jnp.float32) + b)
        h = outs[0] if len(outs) == 1 else jnp.concatenate(outs, axis=1)
        if relu:
            h = jnp.maximum(h, 0.0)
    o_ref[...] = h.astype(o_ref.dtype)


# --------------------------- pallas_call wrapper -----------------------------

def _vmem_budget_bytes(TB, K, n_out_pad, levels, resident_bytes):
    """Generous VMEM estimate (lane-padded tiles, x/out double-buffered)."""
    def lanes(n):
        return _round_up(max(n, 1), 128)
    widths = [lanes(K), lanes(n_out_pad)]
    for chunks, _ in levels:
        widths.append(lanes(sum(c[0].shape[1] for c in chunks)))
    act = TB * max(widths) * 4
    io = 2 * TB * (lanes(K) + lanes(n_out_pad)) * 4
    need = 2 * resident_bytes + io + 8 * act
    return int(min(max(need, 16 << 20), 48 << 20))


def fused_mlp_forward(x, levels, n_out_pad, *, max_batch_tile=1024):
    """Run the entire packed MLP (shared + all task heads) in one pallas_call.

    levels: list of (chunks, relu); chunk = (W, b, in_start) with W:(K_c, N_c),
            b:(1, N_c) already BN-folded / task-packed / lane-padded.
    Output is (B, n_out_pad) f32 (caller slices off padding columns).
    """
    B, K = x.shape
    B8 = _round_up(max(B, 1), 8)
    TB = min(max_batch_tile, B8)
    # v7x has 2 TensorCores: if a single (large) tile would cover the whole
    # batch, split it so the "parallel" grid axis shards across both cores.
    if B8 // TB <= 1 and TB >= 512:
        TB = _round_up((TB + 1) // 2, 8)
    B_pad = _round_up(B, TB)
    if B_pad != B:
        x = jnp.pad(x, ((0, B_pad - B), (0, 0)))

    flat_args = [x]
    level_specs = []
    resident_bytes = 0
    for chunks, relu in levels:
        meta = []
        for (w, b, in_start) in chunks:
            flat_args += [w, b]
            resident_bytes += w.size * w.dtype.itemsize + b.size * b.dtype.itemsize
            meta.append((int(in_start), int(w.shape[0])))
        level_specs.append((tuple(meta), bool(relu)))

    kernel = functools.partial(_fused_mlp_kernel, level_specs=tuple(level_specs))
    vmem_limit = _vmem_budget_bytes(TB, K, n_out_pad, levels, resident_bytes)

    def _const_spec(shape, mode):
        # constant index_map -> block never changes; single buffer is enough
        if mode is None:
            return pl.BlockSpec(shape, lambda i: (0, 0))
        return pl.BlockSpec(shape, lambda i: (0, 0), pipeline_mode=mode)

    def call(weight_mode):
        in_specs = [pl.BlockSpec((TB, K), lambda i: (i, 0))]
        for chunks, _ in levels:
            for (w, b, _) in chunks:
                in_specs.append(_const_spec(w.shape, weight_mode))
                in_specs.append(_const_spec(b.shape, weight_mode))
        return pl.pallas_call(
            kernel,
            out_shape=jax.ShapeDtypeStruct((B_pad, n_out_pad), jnp.float32),
            grid=(B_pad // TB,),
            in_specs=in_specs,
            out_specs=pl.BlockSpec((TB, n_out_pad), lambda i: (i, 0)),
            compiler_params=pltpu.CompilerParams(
                dimension_semantics=("parallel",),
                vmem_limit_bytes=vmem_limit),
        )(*flat_args)

    try:
        out = call(pl.Buffered(1))   # single-buffer the resident weights/biases
    except Exception:                # pragma: no cover - jax without pipeline_mode
        out = call(None)
    return out[:B, :]


# --------------------------- parameter helpers ------------------------------

def _init_linear(key, in_dim, out_dim):
    """Deterministic Linear params. W as (in_dim, out_dim), b as (1, out_dim)."""
    k_w, k_b = jax.random.split(key)
    bound = 1.0 / jnp.sqrt(jnp.float32(in_dim))
    w = jax.random.uniform(k_w, (in_dim, out_dim), jnp.float32, -bound, bound)
    b = jax.random.uniform(k_b, (1, out_dim), jnp.float32, -bound, bound)
    return w, b


def _init_bn(key, dim, eps=1e-5):
    """Deterministic BatchNorm1d (eval) params as per-feature (scale, shift), (1, dim)."""
    k_g, k_b, k_m, k_v = jax.random.split(key, 4)
    gamma = 1.0 + 0.1 * jax.random.normal(k_g, (1, dim), jnp.float32)
    beta = 0.1 * jax.random.normal(k_b, (1, dim), jnp.float32)
    running_mean = 0.1 * jax.random.normal(k_m, (1, dim), jnp.float32)
    running_var = jnp.abs(1.0 + 0.1 * jax.random.normal(k_v, (1, dim), jnp.float32))
    scale = gamma / jnp.sqrt(running_var + eps)
    shift = beta - running_mean * scale
    return scale, shift


def build_params(key, n_features, layer_sizes, hidden_layer_sizes, n_tasks):
    """Raw (unfolded, unpacked) parameters mirroring the PyTorch module."""
    params = {"shared": [], "tasks": []}
    prev = n_features
    for size in layer_sizes:
        key, k1, k2 = jax.random.split(key, 3)
        w, b = _init_linear(k1, prev, size)
        scale, shift = _init_bn(k2, size)
        params["shared"].append((w, b, scale, shift))
        prev = size
    final_shared = prev
    for _ in range(n_tasks):
        hidden = []
        tsize = final_shared
        for size in hidden_layer_sizes:
            key, k1, k2 = jax.random.split(key, 3)
            w, b = _init_linear(k1, tsize, size)
            scale, shift = _init_bn(k2, size)
            hidden.append((w, b, scale, shift))
            tsize = size
        key, k1 = jax.random.split(key)
        w_out, b_out = _init_linear(k1, tsize, 1)
        params["tasks"].append({"hidden": hidden, "out": (w_out, b_out)})
    return params


def _block_diag(mats):
    rows = sum(m.shape[0] for m in mats)
    cols = sum(m.shape[1] for m in mats)
    out = jnp.zeros((rows, cols), mats[0].dtype)
    r = c = 0
    for m in mats:
        out = out.at[r:r + m.shape[0], c:c + m.shape[1]].set(m)
        r += m.shape[0]
        c += m.shape[1]
    return out


def pack_params(raw, n_tasks, *, weight_dtype=jnp.float32,
                max_pack_lanes=256, out_lane_pad=128):
    """Fold BN into W/b and pack the per-task heads lane-wise.

    Returns (levels, n_tasks, n_out_pad). levels is a list of (chunks, relu)
    with chunk = (W, b, in_start).  Block-diag packing is capped at one MXU
    tile (max_pack_lanes) per group of tasks; the final packed head is
    zero-padded to a lane-dense width (multiple of out_lane_pad=128).
    """
    def fold(w, b, scale, shift):
        return (w * scale).astype(weight_dtype), (b * scale + shift).astype(jnp.float32)

    levels = []
    # shared layers: fold BN affine into the linear.
    for (w, b, scale, shift) in raw["shared"]:
        W, bb = fold(w, b, scale, shift)
        levels.append(([(W, bb, 0)], True))

    n_hidden = len(raw["tasks"][0]["hidden"])
    hidden_sizes = [raw["tasks"][0]["hidden"][j][0].shape[1] for j in range(n_hidden)]

    # group tasks so every block-diag group stays within one MXU tile of lanes
    if n_hidden > 0:
        tasks_per_group = max(1, max_pack_lanes // max(hidden_sizes))
    else:
        tasks_per_group = n_tasks
    groups = [list(range(s, min(s + tasks_per_group, n_tasks)))
              for s in range(0, n_tasks, tasks_per_group)]

    # task hidden level 0: every head reads the shared features -> lane-concat
    if n_hidden > 0:
        ws, bs = [], []
        for t in range(n_tasks):
            w, b, scale, shift = raw["tasks"][t]["hidden"][0]
            W, bb = fold(w, b, scale, shift)
            ws.append(W)
            bs.append(bb)
        levels.append(([(jnp.concatenate(ws, 1), jnp.concatenate(bs, 1), 0)], True))

    # deeper hidden levels: block-diagonal per group (each group reads its own lanes)
    for j in range(1, n_hidden):
        h_prev = hidden_sizes[j - 1]
        chunks = []
        for g in groups:
            ws, bs = [], []
            for t in g:
                w, b, scale, shift = raw["tasks"][t]["hidden"][j]
                W, bb = fold(w, b, scale, shift)
                ws.append(W)
                bs.append(bb)
            chunks.append((_block_diag(ws), jnp.concatenate(bs, 1), g[0] * h_prev))
        levels.append((chunks, True))

    # final per-task Linear(., 1) heads
    if n_hidden > 0:
        h_last = hidden_sizes[-1]
        chunks = []
        for g in groups:
            ws = [raw["tasks"][t]["out"][0].astype(weight_dtype) for t in g]
            bs = [raw["tasks"][t]["out"][1].astype(jnp.float32) for t in g]
            chunks.append((_block_diag(ws), jnp.concatenate(bs, 1), g[0] * h_last))
    else:
        ws = [raw["tasks"][t]["out"][0].astype(weight_dtype) for t in range(n_tasks)]
        bs = [raw["tasks"][t]["out"][1].astype(jnp.float32) for t in range(n_tasks)]
        chunks = [(jnp.concatenate(ws, 1), jnp.concatenate(bs, 1), 0)]

    # lane-dense output: zero-pad the last chunk so total width is a multiple of 128
    n_out_pad = _round_up(max(n_tasks, 1), out_lane_pad)
    pad_cols = n_out_pad - n_tasks
    if pad_cols > 0:
        Wl, bl, sl = chunks[-1]
        chunks[-1] = (jnp.pad(Wl, ((0, 0), (0, pad_cols))),
                      jnp.pad(bl, ((0, 0), (0, pad_cols))), sl)
    levels.append((chunks, False))
    return levels, n_tasks, n_out_pad


# ------------------------------ forward pass --------------------------------

def dnn_multitask_forward(x, levels, n_tasks, n_out_pad):
    """Forward pass matching DNNMultiTaskClassifier.forward (eval mode)."""
    B = x.shape[0]
    x = x.reshape(B, -1)                              # x.view(x.size(0), -1)
    out = fused_mlp_forward(x, levels, n_out_pad)     # (B, n_out_pad) lane-dense
    return out[:, :n_tasks]                           # (B, n_tasks)


# pure-JAX reference on the RAW (unfolded, unpacked) params
def ref_forward(x, params):
    h = x.reshape(x.shape[0], -1)
    for (w, b, scale, shift) in params["shared"]:
        h = jnp.maximum((h @ w + b) * scale + shift, 0.0)
    outs = []
    for task in params["tasks"]:
        t = h
        for (w, b, scale, shift) in task["hidden"]:
            t = jnp.maximum((t @ w + b) * scale + shift, 0.0)
        w_out, b_out = task["out"]
        outs.append((t @ w_out + b_out)[:, 0])
    return jnp.stack(outs, axis=1)


# ----------------------------------- main ------------------------------------

if __name__ == "__main__":
    # small, module-consistent shapes
    batch = 8
    n_features = 64
    layer_sizes = [32, 32]
    dropouts = [0.1, 0.1]                 # identity in eval mode
    hidden_layer_sizes = [16]
    hidden_layer_dropouts = [0.1]         # identity in eval mode
    n_tasks = 3

    key = jax.random.PRNGKey(0)
    k_params, k_x, k_params2 = jax.random.split(key, 3)
    raw = build_params(k_params, n_features, layer_sizes, hidden_layer_sizes, n_tasks)
    x = jax.random.normal(k_x, (batch, n_features), jnp.float32)
    ref = ref_forward(x, raw)

    # 1) f32 weights (exact path)
    levels, _, n_out_pad = pack_params(raw, n_tasks)
    out = jax.block_until_ready(dnn_multitask_forward(x, levels, n_tasks, n_out_pad))
    assert out.shape == (batch, n_tasks)
    assert jnp.allclose(out, ref, atol=1e-4, rtol=1e-4)

    # 2) bf16 MXU operands, f32 bias/ReLU/accumulate (v6e/v7x fast path)
    levels_bf16, _, pad_bf16 = pack_params(raw, n_tasks, weight_dtype=jnp.bfloat16)
    out_bf16 = jax.block_until_ready(dnn_multitask_forward(x, levels_bf16, n_tasks, pad_bf16))
    assert out_bf16.shape == (batch, n_tasks)
    assert jnp.allclose(out_bf16, ref, atol=5e-2, rtol=5e-2)

    # 3) grouped block-diag packing (many-task path capped at one MXU tile)
    n_tasks_g = 5
    raw_g = build_params(k_params2, n_features, [32], [16, 16], n_tasks_g)
    ref_g = ref_forward(x, raw_g)
    levels_g, _, pad_g = pack_params(raw_g, n_tasks_g, max_pack_lanes=32)
    out_g = jax.block_until_ready(dnn_multitask_forward(x, levels_g, n_tasks_g, pad_g))
    assert out_g.shape == (batch, n_tasks_g)
    assert jnp.allclose(out_g, ref_g, atol=1e-4, rtol=1e-4)

    print("KERNEL_OK")
</pallas_src>

<mosaic_0001>
module attributes {stable_mosaic.version = 11 : i64} {
  func.func @_fused_mlp_kernel(%arg0: i32, %arg1: memref<8x64xf32, #tpu.memory_space<vmem>>, %arg2: memref<64x32xf32, #tpu.memory_space<vmem>>, %arg3: memref<1x32xf32, #tpu.memory_space<vmem>>, %arg4: memref<32x32xf32, #tpu.memory_space<vmem>>, %arg5: memref<1x32xf32, #tpu.memory_space<vmem>>, %arg6: memref<32x48xf32, #tpu.memory_space<vmem>>, %arg7: memref<1x48xf32, #tpu.memory_space<vmem>>, %arg8: memref<48x128xf32, #tpu.memory_space<vmem>>, %arg9: memref<1x128xf32, #tpu.memory_space<vmem>>, %arg10: memref<8x128xf32, #tpu.memory_space<vmem>>) attributes {dimension_semantics = [#tpu.dimension_semantics<parallel>], iteration_bounds = array<i64: 1>, scalar_prefetch = 0 : i64, scratch_operands = 0 : i64, tpu.core_type = #tpu.core_type<tc>, window_params = [{transform_indices = @transform_0, window_bounds = array<i64: 8, 64>}, {pipeline_mode = #tpu.pipeline_mode<synchronous>, transform_indices = @transform_1, window_bounds = array<i64: 64, 32>}, {pipeline_mode = #tpu.pipeline_mode<synchronous>, transform_indices = @transform_2, window_bounds = array<i64: 1, 32>}, {pipeline_mode = #tpu.pipeline_mode<synchronous>, transform_indices = @transform_3, window_bounds = array<i64: 32, 32>}, {pipeline_mode = #tpu.pipeline_mode<synchronous>, transform_indices = @transform_4, window_bounds = array<i64: 1, 32>}, {pipeline_mode = #tpu.pipeline_mode<synchronous>, transform_indices = @transform_5, window_bounds = array<i64: 32, 48>}, {pipeline_mode = #tpu.pipeline_mode<synchronous>, transform_indices = @transform_6, window_bounds = array<i64: 1, 48>}, {pipeline_mode = #tpu.pipeline_mode<synchronous>, transform_indices = @transform_7, window_bounds = array<i64: 48, 128>}, {pipeline_mode = #tpu.pipeline_mode<synchronous>, transform_indices = @transform_8, window_bounds = array<i64: 1, 128>}, {transform_indices = @transform_9, window_bounds = array<i64: 8, 128>}]} {
    %c0 = arith.constant 0 : index
    %c0_0 = arith.constant 0 : index
    %0 = vector.load %arg1[%c0, %c0_0] : memref<8x64xf32, #tpu.memory_space<vmem>>, vector<8x64xf32>
    %c0_1 = arith.constant 0 : index
    %c0_2 = arith.constant 0 : index
    %1 = vector.load %arg2[%c0_1, %c0_2] : memref<64x32xf32, #tpu.memory_space<vmem>>, vector<64x32xf32>
    %c0_3 = arith.constant 0 : index
    %c0_4 = arith.constant 0 : index
    %2 = vector.load %arg3[%c0_3, %c0_4] : memref<1x32xf32, #tpu.memory_space<vmem>>, vector<1x32xf32>
    %cst = arith.constant dense<0.000000e+00> : vector<8x32xf32>
    %3 = tpu.matmul %0, %1, %cst {dimension_numbers = #tpu.dot_dimension_numbers<[1], [0], [0], [1], [0, 0, 1, 1], [], []>} : vector<8x64xf32>, vector<64x32xf32>, vector<8x32xf32> -> vector<8x32xf32>
    %4 = vector.broadcast %2 : vector<1x32xf32> to vector<8x32xf32>
    %5 = arith.addf %3, %4 : vector<8x32xf32>
    %cst_5 = arith.constant 0.000000e+00 : f32
    %6 = vector.broadcast %cst_5 : f32 to vector<8x32xf32>
    %7 = arith.maximumf %5, %6 : vector<8x32xf32>
    %c0_6 = arith.constant 0 : index
    %c0_7 = arith.constant 0 : index
    %8 = vector.load %arg4[%c0_6, %c0_7] : memref<32x32xf32, #tpu.memory_space<vmem>>, vector<32x32xf32>
    %c0_8 = arith.constant 0 : index
    %c0_9 = arith.constant 0 : index
    %9 = vector.load %arg5[%c0_8, %c0_9] : memref<1x32xf32, #tpu.memory_space<vmem>>, vector<1x32xf32>
    %cst_10 = arith.constant dense<0.000000e+00> : vector<8x32xf32>
    %10 = tpu.matmul %7, %8, %cst_10 {dimension_numbers = #tpu.dot_dimension_numbers<[1], [0], [0], [1], [0, 0, 1, 1], [], []>} : vector<8x32xf32>, vector<32x32xf32>, vector<8x32xf32> -> vector<8x32xf32>
    %11 = vector.broadcast %9 : vector<1x32xf32> to vector<8x32xf32>
    %12 = arith.addf %10, %11 : vector<8x32xf32>
    %cst_11 = arith.constant 0.000000e+00 : f32
    %13 = vector.broadcast %cst_11 : f32 to vector<8x32xf32>
    %14 = arith.maximumf %12, %13 : vector<8x32xf32>
    %c0_12 = arith.constant 0 : index
    %c0_13 = arith.constant 0 : index
    %15 = vector.load %arg6[%c0_12, %c0_13] : memref<32x48xf32, #tpu.memory_space<vmem>>, vector<32x48xf32>
    %c0_14 = arith.constant 0 : index
    %c0_15 = arith.constant 0 : index
    %16 = vector.load %arg7[%c0_14, %c0_15] : memref<1x48xf32, #tpu.memory_space<vmem>>, vector<1x48xf32>
    %cst_16 = arith.constant dense<0.000000e+00> : vector<8x48xf32>
    %17 = tpu.matmul %14, %15, %cst_16 {dimension_numbers = #tpu.dot_dimension_numbers<[1], [0], [0], [1], [0, 0, 1, 1], [], []>} : vector<8x32xf32>, vector<32x48xf32>, vector<8x48xf32> -> vector<8x48xf32>
    %18 = vector.broadcast %16 : vector<1x48xf32> to vector<8x48xf32>
    %19 = arith.addf %17, %18 : vector<8x48xf32>
    %cst_17 = arith.constant 0.000000e+00 : f32
    %20 = vector.broadcast %cst_17 : f32 to vector<8x48xf32>
    %21 = arith.maximumf %19, %20 : vector<8x48xf32>
    %c0_18 = arith.constant 0 : index
    %c0_19 = arith.constant 0 : index
    %22 = vector.load %arg8[%c0_18, %c0_19] : memref<48x128xf32, #tpu.memory_space<vmem>>, vector<48x128xf32>
    %c0_20 = arith.constant 0 : index
    %c0_21 = arith.constant 0 : index
    %23 = vector.load %arg9[%c0_20, %c0_21] : memref<1x128xf32, #tpu.memory_space<vmem>>, vector<1x128xf32>
    %cst_22 = arith.constant dense<0.000000e+00> : vector<8x128xf32>
    %24 = tpu.matmul %21, %22, %cst_22 {dimension_numbers = #tpu.dot_dimension_numbers<[1], [0], [0], [1], [0, 0, 1, 1], [], []>} : vector<8x48xf32>, vector<48x128xf32>, vector<8x128xf32> -> vector<8x128xf32>
    %25 = vector.broadcast %23 : vector<1x128xf32> to vector<8x128xf32>
    %26 = arith.addf %24, %25 : vector<8x128xf32>
    %c0_23 = arith.constant 0 : index
    %c0_24 = arith.constant 0 : index
    %27 = vector.load %arg10[%c0_23, %c0_24] : memref<8x128xf32, #tpu.memory_space<vmem>>, vector<8x128xf32>
    tpu.vector_store %arg10[%c0_23, %c0_24], %26 {strides = array<i32>} : memref<8x128xf32, #tpu.memory_space<vmem>>, vector<8x128xf32>,
    return
  }
  func.func @transform_0(%arg0: i32) -> (i32, i32) {
    %c0_i32 = arith.constant 0 : i32
    %c0_i32_0 = arith.constant 0 : i32
    return %arg0, %c0_i32 : i32, i32
  }
  func.func @transform_1(%arg0: i32) -> (i32, i32) {
    %c0_i32 = arith.constant 0 : i32
    %c0_i32_0 = arith.constant 0 : i32
    %c0_i32_1 = arith.constant 0 : i32
    return %c0_i32, %c0_i32_0 : i32, i32
  }
  func.func @transform_2(%arg0: i32) -> (i32, i32) {
    %c0_i32 = arith.constant 0 : i32
    %c0_i32_0 = arith.constant 0 : i32
    %c0_i32_1 = arith.constant 0 : i32
    return %c0_i32, %c0_i32_0 : i32, i32
  }
  func.func @transform_3(%arg0: i32) -> (i32, i32) {
    %c0_i32 = arith.constant 0 : i32
    %c0_i32_0 = arith.constant 0 : i32
    %c0_i32_1 = arith.constant 0 : i32
    return %c0_i32, %c0_i32_0 : i32, i32
  }
  func.func @transform_4(%arg0: i32) -> (i32, i32) {
    %c0_i32 = arith.constant 0 : i32
    %c0_i32_0 = arith.constant 0 : i32
    %c0_i32_1 = arith.constant 0 : i32
    return %c0_i32, %c0_i32_0 : i32, i32
  }
  func.func @transform_5(%arg0: i32) -> (i32, i32) {
    %c0_i32 = arith.constant 0 : i32
    %c0_i32_0 = arith.constant 0 : i32
    %c0_i32_1 = arith.constant 0 : i32
    return %c0_i32, %c0_i32_0 : i32, i32
  }
  func.func @transform_6(%arg0: i32) -> (i32, i32) {
    %c0_i32 = arith.constant 0 : i32
    %c0_i32_0 = arith.constant 0 : i32
    %c0_i32_1 = arith.constant 0 : i32
    return %c0_i32, %c0_i32_0 : i32, i32
  }
  func.func @transform_7(%arg0: i32) -> (i32, i32) {
    %c0_i32 = arith.constant 0 : i32
    %c0_i32_0 = arith.constant 0 : i32
    %c0_i32_1 = arith.constant 0 : i32
    return %c0_i32, %c0_i32_0 : i32, i32
  }
  func.func @transform_8(%arg0: i32) -> (i32, i32) {
    %c0_i32 = arith.constant 0 : i32
    %c0_i32_0 = arith.constant 0 : i32
    %c0_i32_1 = arith.constant 0 : i32
    return %c0_i32, %c0_i32_0 : i32, i32
  }
  func.func @transform_9(%arg0: i32) -> (i32, i32) {
    %c0_i32 = arith.constant 0 : i32
    %c0_i32_0 = arith.constant 0 : i32
    return %arg0, %c0_i32 : i32, i32
  }
}

module attributes {stable_mosaic.version = 11 : i64} {
  func.func @_fused_mlp_kernel(%arg0: i32, %arg1: memref<8x64xf32, #tpu.memory_space<vmem>>, %arg2: memref<64x32xf32, #tpu.memory_space<vmem>>, %arg3: memref<1x32xf32, #tpu.memory_space<vmem>>, %arg4: memref<32x32xf32, #tpu.memory_space<vmem>>, %arg5: memref<1x32xf32, #tpu.memory_space<vmem>>, %arg6: memref<32x48xf32, #tpu.memory_space<vmem>>, %arg7: memref<1x48xf32, #tpu.memory_space<vmem>>, %arg8: memref<48x128xf32, #tpu.memory_space<vmem>>, %arg9: memref<1x128xf32, #tpu.memory_space<vmem>>, %arg10: memref<8x128xf32, #tpu.memory_space<vmem>>) attributes {dimension_semantics = [#tpu.dimension_semantics<parallel>], iteration_bounds = array<i64: 1>, scalar_prefetch = 0 : i64, scratch_operands = 0 : i64, tpu.core_type = #tpu.core_type<tc>, window_params = [{transform_indices = @transform_0, window_bounds = array<i64: 8, 64>}, {pipeline_mode = #tpu.pipeline_mode<synchronous>, transform_indices = @transform_1, window_bounds = array<i64: 64, 32>}, {pipeline_mode = #tpu.pipeline_mode<synchronous>, transform_indices = @transform_2, window_bounds = array<i64: 1, 32>}, {pipeline_mode = #tpu.pipeline_mode<synchronous>, transform_indices = @transform_3, window_bounds = array<i64: 32, 32>}, {pipeline_mode = #tpu.pipeline_mode<synchronous>, transform_indices = @transform_4, window_bounds = array<i64: 1, 32>}, {pipeline_mode = #tpu.pipeline_mode<synchronous>, transform_indices = @transform_5, window_bounds = array<i64: 32, 48>}, {pipeline_mode = #tpu.pipeline_mode<synchronous>, transform_indices = @transform_6, window_bounds = array<i64: 1, 48>}, {pipeline_mode = #tpu.pipeline_mode<synchronous>, transform_indices = @transform_7, window_bounds = array<i64: 48, 128>}, {pipeline_mode = #tpu.pipeline_mode<synchronous>, transform_indices = @transform_8, window_bounds = array<i64: 1, 128>}, {transform_indices = @transform_9, window_bounds = array<i64: 8, 128>}]} {
    %c0 = arith.constant 0 : index
    %c0_0 = arith.constant 0 : index
    %0 = vector.load %arg1[%c0, %c0_0] : memref<8x64xf32, #tpu.memory_space<vmem>>, vector<8x64xf32>
    %c0_1 = arith.constant 0 : index
    %c0_2 = arith.constant 0 : index
    %1 = vector.load %arg2[%c0_1, %c0_2] : memref<64x32xf32, #tpu.memory_space<vmem>>, vector<64x32xf32>
    %c0_3 = arith.constant 0 : index
    %c0_4 = arith.constant 0 : index
    %2 = vector.load %arg3[%c0_3, %c0_4] : memref<1x32xf32, #tpu.memory_space<vmem>>, vector<1x32xf32>
    %cst = arith.constant dense<0.000000e+00> : vector<8x32xf32>
    %3 = tpu.matmul %0, %1, %cst {dimension_numbers = #tpu.dot_dimension_numbers<[1], [0], [0], [1], [0, 0, 1, 1], [], []>} : vector<8x64xf32>, vector<64x32xf32>, vector<8x32xf32> -> vector<8x32xf32>
    %4 = vector.broadcast %2 : vector<1x32xf32> to vector<8x32xf32>
    %5 = arith.addf %3, %4 : vector<8x32xf32>
    %cst_5 = arith.constant 0.000000e+00 : f32
    %6 = vector.broadcast %cst_5 : f32 to vector<8x32xf32>
    %7 = arith.maximumf %5, %6 : vector<8x32xf32>
    %c0_6 = arith.constant 0 : index
    %c0_7 = arith.constant 0 : index
    %8 = vector.load %arg4[%c0_6, %c0_7] : memref<32x32xf32, #tpu.memory_space<vmem>>, vector<32x32xf32>
    %c0_8 = arith.constant 0 : index
    %c0_9 = arith.constant 0 : index
    %9 = vector.load %arg5[%c0_8, %c0_9] : memref<1x32xf32, #tpu.memory_space<vmem>>, vector<1x32xf32>
    %cst_10 = arith.constant dense<0.000000e+00> : vector<8x32xf32>
    %10 = tpu.matmul %7, %8, %cst_10 {dimension_numbers = #tpu.dot_dimension_numbers<[1], [0], [0], [1], [0, 0, 1, 1], [], []>} : vector<8x32xf32>, vector<32x32xf32>, vector<8x32xf32> -> vector<8x32xf32>
    %11 = vector.broadcast %9 : vector<1x32xf32> to vector<8x32xf32>
    %12 = arith.addf %10, %11 : vector<8x32xf32>
    %cst_11 = arith.constant 0.000000e+00 : f32
    %13 = vector.broadcast %cst_11 : f32 to vector<8x32xf32>
    %14 = arith.maximumf %12, %13 : vector<8x32xf32>
    %c0_12 = arith.constant 0 : index
    %c0_13 = arith.constant 0 : index
    %15 = vector.load %arg6[%c0_12, %c0_13] : memref<32x48xf32, #tpu.memory_space<vmem>>, vector<32x48xf32>
    %c0_14 = arith.constant 0 : index
    %c0_15 = arith.constant 0 : index
    %16 = vector.load %arg7[%c0_14, %c0_15] : memref<1x48xf32, #tpu.memory_space<vmem>>, vector<1x48xf32>
    %cst_16 = arith.constant dense<0.000000e+00> : vector<8x48xf32>
    %17 = tpu.matmul %14, %15, %cst_16 {dimension_numbers = #tpu.dot_dimension_numbers<[1], [0], [0], [1], [0, 0, 1, 1], [], []>} : vector<8x32xf32>, vector<32x48xf32>, vector<8x48xf32> -> vector<8x48xf32>
    %18 = vector.broadcast %16 : vector<1x48xf32> to vector<8x48xf32>
    %19 = arith.addf %17, %18 : vector<8x48xf32>
    %cst_17 = arith.constant 0.000000e+00 : f32
    %20 = vector.broadcast %cst_17 : f32 to vector<8x48xf32>
    %21 = arith.maximumf %19, %20 : vector<8x48xf32>
    %c0_18 = arith.constant 0 : index
    %c0_19 = arith.constant 0 : index
    %22 = vector.load %arg8[%c0_18, %c0_19] : memref<48x128xf32, #tpu.memory_space<vmem>>, vector<48x128xf32>
    %c0_20 = arith.constant 0 : index
    %c0_21 = arith.constant 0 : index
    %23 = vector.load %arg9[%c0_20, %c0_21] : memref<1x128xf32, #tpu.memory_space<vmem>>, vector<1x128xf32>
    %cst_22 = arith.constant dense<0.000000e+00> : vector<8x128xf32>
    %24 = tpu.matmul %21, %22, %cst_22 {dimension_numbers = #tpu.dot_dimension_numbers<[1], [0], [0], [1], [0, 0, 1, 1], [], []>} : vector<8x48xf32>, vector<48x128xf32>, vector<8x128xf32> -> vector<8x128xf32>
    %25 = vector.broadcast %23 : vector<1x128xf32> to vector<8x128xf32>
    %26 = arith.addf %24, %25 : vector<8x128xf32>
    %c0_23 = arith.constant 0 : index
    %c0_24 = arith.constant 0 : index
    %27 = vector.load %arg10[%c0_23, %c0_24] : memref<8x128xf32, #tpu.memory_space<vmem>>, vector<8x128xf32>
    tpu.vector_store %arg10[%c0_23, %c0_24], %26 {strides = array<i32>} : memref<8x128xf32, #tpu.memory_space<vmem>>, vector<8x128xf32>,
    return
  }
  func.func @transform_0(%arg0: i32) -> (i32, i32) {
    %c0_i32 = arith.constant 0 : i32
    %c0_i32_0 = arith.constant 0 : i32
    return %arg0, %c0_i32 : i32, i32
  }
  func.func @transform_1(%arg0: i32) -> (i32, i32) {
    %c0_i32 = arith.constant 0 : i32
    %c0_i32_0 = arith.constant 0 : i32
    %c0_i32_1 = arith.constant 0 : i32
    return %c0_i32, %c0_i32_0 : i32, i32
  }
  func.func @transform_2(%arg0: i32) -> (i32, i32) {
    %c0_i32 = arith.constant 0 : i32
    %c0_i32_0 = arith.constant 0 : i32
    %c0_i32_1 = arith.constant 0 : i32
    return %c0_i32, %c0_i32_0 : i32, i32
  }
  func.func @transform_3(%arg0: i32) -> (i32, i32) {
    %c0_i32 = arith.constant 0 : i32
    %c0_i32_0 = arith.constant 0 : i32
    %c0_i32_1 = arith.constant 0 : i32
    return %c0_i32, %c0_i32_0 : i32, i32
  }
  func.func @transform_4(%arg0: i32) -> (i32, i32) {
    %c0_i32 = arith.constant 0 : i32
    %c0_i32_0 = arith.constant 0 : i32
    %c0_i32_1 = arith.constant 0 : i32
    return %c0_i32, %c0_i32_0 : i32, i32
  }
  func.func @transform_5(%arg0: i32) -> (i32, i32) {
    %c0_i32 = arith.constant 0 : i32
    %c0_i32_0 = arith.constant 0 : i32
    %c0_i32_1 = arith.constant 0 : i32
    return %c0_i32, %c0_i32_0 : i32, i32
  }
  func.func @transform_6(%arg0: i32) -> (i32, i32) {
    %c0_i32 = arith.constant 0 : i32
    %c0_i32_0 = arith.constant 0 : i32
    %c0_i32_1 = arith.constant 0 : i32
    return %c0_i32, %c0_i32_0 : i32, i32
  }
  func.func @transform_7(%arg0: i32) -> (i32, i32) {
    %c0_i32 = arith.constant 0 : i32
    %c0_i32_0 = arith.constant 0 : i32
    %c0_i32_1 = arith.constant 0 : i32
    return %c0_i32, %c0_i32_0 : i32, i32
  }
  func.func @transform_8(%arg0: i32) -> (i32, i32) {
    %c0_i32 = arith.constant 0 : i32
    %c0_i32_0 = arith.constant 0 : i32
    %c0_i32_1 = arith.constant 0 : i32
    return %c0_i32, %c0_i32_0 : i32, i32
  }
  func.func @transform_9(%arg0: i32) -> (i32, i32) {
    %c0_i32 = arith.constant 0 : i32
    %c0_i32_0 = arith.constant 0 : i32
    return %arg0, %c0_i32 : i32, i32
  }
}

</mosaic_0001>

<llo_original>
// kernel: tpu_custom_call.1
$region0: #{tpu_custom_call.1}
  #allocation0 [shape = 'u32[]', space=smem, size = 0x4, offset = 0x4, fixed_abs, tag = 'smem constant byte address 0x4 - core index']
  #allocation1 [shape = 'u32[72,128]{1,0:T(1,128)}', space=vmem, size = 0x9000, scoped, tag = 'internal scratch']
  %s0 = inlined_call_operand.vmem [shape: f32[8,64], index: 0, kind: input, shape index: {}]
  %s1 = inlined_call_operand.vmem [shape: f32[64,32], index: 1, kind: input, shape index: {}]
  %s2 = inlined_call_operand.vmem [shape: f32[1,32], index: 2, kind: input, shape index: {}]
  %s3 = inlined_call_operand.vmem [shape: f32[32,32], index: 3, kind: input, shape index: {}]
  %s4 = inlined_call_operand.vmem [shape: f32[1,32], index: 4, kind: input, shape index: {}]
  %s5 = inlined_call_operand.hbm [shape: f32[32,48], index: 5, kind: input, shape index: {}]
  %s6 = inlined_call_operand.vmem [shape: f32[1,48], index: 6, kind: input, shape index: {}]
  %s7 = inlined_call_operand.vmem [shape: f32[48,128], index: 7, kind: input, shape index: {}]
  %s8 = inlined_call_operand.vmem [shape: f32[1,128], index: 8, kind: input, shape index: {}]
  %s9 = inlined_call_operand.hbm [shape: f32[8,128], index: 9, kind: output, shape index: {}]
  %s10 = sld [smem:[#allocation0]]
  $region50: #{tpu_custom_call.1} parent=0
    _
  %s12 = ssub.s32 1, %s10
  %s13 = scalar_select 0, %s12, %s10
  $region1: #{tpu_custom_call.1} parent=0
    #allocation2 [shape = 'u8[16384]{0}', space=vmem, size = 0x4000, scoped, tag = 'input window, operand 5, single buffered']
    #allocation3 [shape = 's32[1]{0}', space=sflag, size = 0x4, scoped, tag = 'scoped memory for tpu_custom_call.1']
    #allocation4 [shape = 's32[1]{0}', space=sflag, size = 0x4, scoped, tag = 'scoped memory for tpu_custom_call.1']
    #allocation5 [shape = 'u8[4096]{0}', space=vmem, size = 0x1000, scoped, tag = 'output window, operand 0, single buffered']
    %14 = vsyncpa [#allocation3], 0
    %15 = vsyncpa [#allocation4], 0
    // Predicated region
    $region2: #{tpu_custom_call.1} parent=1 // pred_check
      _
    $region3: #{tpu_custom_call.1} parent=1 // pred_check_branch
      %17 = sbr.rel (0) target = $region5
    $region4: #{tpu_custom_call.1} parent=1 // pred_region
      _
    $region5: #{tpu_custom_call.1} parent=1 // pred_fallthru
      _
    // Predicated region
    $region6: #{tpu_custom_call.1} parent=1 // pred_check
      _
    $region7: #{tpu_custom_call.1} parent=1 // pred_check_branch
      %19 = sbr.rel (0) target = $region9
    $region8: #{tpu_custom_call.1} parent=1 // pred_region
      _
    $region9: #{tpu_custom_call.1} parent=1 // pred_fallthru
      _
    // Predicated region
    $region10: #{tpu_custom_call.1} parent=1 // pred_check
      _
    $region11: #{tpu_custom_call.1} parent=1 // pred_check_branch
      %21 = sbr.rel (0) target = $region13
    $region12: #{tpu_custom_call.1} parent=1 // pred_region
      _
    $region13: #{tpu_custom_call.1} parent=1 // pred_fallthru
      _
    // Predicated region
    $region14: #{tpu_custom_call.1} parent=1 // pred_check
      _
    $region15: #{tpu_custom_call.1} parent=1 // pred_check_branch
      %23 = sbr.rel (0) target = $region17
    $region16: #{tpu_custom_call.1} parent=1 // pred_region
      _
    $region17: #{tpu_custom_call.1} parent=1 // pred_fallthru
      _
    // Predicated region
    $region18: #{tpu_custom_call.1} parent=1 // pred_check
      _
    $region19: #{tpu_custom_call.1} parent=1 // pred_check_branch
      %25 = sbr.rel (0) target = $region21
    $region20: #{tpu_custom_call.1} parent=1 // pred_region
      _
    $region21: #{tpu_custom_call.1} parent=1 // pred_fallthru
      _
    // Predicated region
    $region22: #{tpu_custom_call.1} parent=1 // pred_check
      _
    $region23: #{tpu_custom_call.1} parent=1 // pred_check_branch
      %27 = sbr.rel (0) target = $region25
    $region24: #{tpu_custom_call.1} parent=1 // pred_region
      %29 = vsyncadd [#allocation3], 0
      %s30 = sshll.u32 %s5, 4
      %s31 = int_to_ptr.hbm [resolvable:$true] %s30
      %s32 = sshll.u32 [#allocation2], 4
      %s33 = int_to_ptr.vmem [resolvable:$true] %s32
      %38 = dma.hbm_to_vmem [thread:$0]  %s31, 512, %s33, [#allocation3], 128, 128, 8
    $region25: #{tpu_custom_call.1} parent=1 // pred_fallthru
      _
    // Predicated region
    $region26: #{tpu_custom_call.1} parent=1 // pred_check
      _
    $region27: #{tpu_custom_call.1} parent=1 // pred_check_branch
      %40 = sbr.rel (0) target = $region29
    $region28: #{tpu_custom_call.1} parent=1 // pred_region
      _
    $region29: #{tpu_custom_call.1} parent=1 // pred_fallthru
      _
    // Predicated region
    $region30: #{tpu_custom_call.1} parent=1 // pred_check
      _
    $region31: #{tpu_custom_call.1} parent=1 // pred_check_branch
      %42 = sbr.rel (0) target = $region33
    $region32: #{tpu_custom_call.1} parent=1 // pred_region
      _
    $region33: #{tpu_custom_call.1} parent=1 // pred_fallthru
      _
    // Predicated region
    $region34: #{tpu_custom_call.1} parent=1 // pred_check
      _
    $region35: #{tpu_custom_call.1} parent=1 // pred_check_branch
      %44 = sbr.rel (0) target = $region37
    $region36: #{tpu_custom_call.1} parent=1 // pred_region
      _
    $region37: #{tpu_custom_call.1} parent=1 // pred_fallthru
      _
    // Predicated region
    $region38: #{tpu_custom_call.1} parent=1 // pred_check
      _
    $region39: #{tpu_custom_call.1} parent=1 // pred_check_branch
      %46 = sbr.rel (0) target = $region41
    $region40: #{tpu_custom_call.1} parent=1 // pred_region
      %48 = dma.done [#allocation3], 512
    $region41: #{tpu_custom_call.1} parent=1 // pred_fallthru
      _
    %v49 = vld [vmem:[%s0] sm:$0xff]
    %v50 = vld [vmem:[%s1] sm:$0xff]
    %v51 = vld [vmem:[%s1 + $0x8] sm:$0xff]
    %v52 = vld [vmem:[%s1 + $0x10] sm:$0xff]
    %v53 = vld [vmem:[%s1 + $0x18] sm:$0xff]
    %v54 = vld [vmem:[%s1 + $0x20] sm:$0xff]
    %v55 = vld [vmem:[%s1 + $0x28] sm:$0xff]
    %v56 = vld [vmem:[%s1 + $0x30] sm:$0xff]
    %v57 = vld [vmem:[%s1 + $0x38] sm:$0xff]
    %v58 = vld [vmem:[%s2] sm:$0x1]
    %v60 = vperm.slane %v58, 0
    %vm62 = vcmask 523264
    %v64 = vsel %vm62, %v49, 0
    %66 = vmatpush.msra.mxu0 0.0
    %67 = vmatpush.msra.mxu0 0.0
    %68 = vmatpush.msra.mxu0 0.0
    %69 = vmatpush.msra.mxu0 0.0
    %70 = vmatpush.msra.mxu0 0.0
    %71 = vmatpush.msra.mxu0 0.0
    %72 = vmatpush.msra.mxu0 0.0
    %73 = vmatpush.msra.mxu0 0.0
    %74 = vmatpush.msra.mxu0 %v57
    %75 = vmatpush.msra.mxu0 %v56
    %76 = vmatpush.msra.mxu0 %v55
    %77 = vmatpush.msra.mxu0 %v54
    %78 = vmatpush.msra.mxu0 %v53
    %79 = vmatpush.msra.mxu0 %v52
    %80 = vmatpush.msra.mxu0 %v51
    %81 = vmatpush.msra.mxu0 %v50
    %82 = vmatmul.f32.gmra.mxu0 %v64
    %v83 = vpop.f32.mrf.mxu0
    %v84 = vadd.f32 %v60, %v83
    %85 = vdwg.mxu0
    %v86 = vmax.f32 %v84, 0.0
    %v87 = vld [vmem:[%s3] sm:$0xff]
    %v88 = vld [vmem:[%s3 + $0x8] sm:$0xff]
    %v89 = vld [vmem:[%s3 + $0x10] sm:$0xff]
    %v90 = vld [vmem:[%s3 + $0x18] sm:$0xff]
    %v91 = vld [vmem:[%s4] sm:$0x1]
    %v93 = vperm.slane %v91, 0
    %vm95 = vcmask 261120
    %v97 = vsel %vm95, %v86, 0
    %99 = vmatpush.msra.mxu0 0.0
    %100 = vmatpush.msra.mxu0 0.0
    %101 = vmatpush.msra.mxu0 0.0
    %102 = vmatpush.msra.mxu0 0.0
    %103 = vmatpush.msra.mxu0 0.0
    %104 = vmatpush.msra.mxu0 0.0
    %105 = vmatpush.msra.mxu0 0.0
    %106 = vmatpush.msra.mxu0 0.0
    %107 = vmatpush.msra.mxu0 0.0
    %108 = vmatpush.msra.mxu0 0.0
    %109 = vmatpush.msra.mxu0 0.0
    %110 = vmatpush.msra.mxu0 0.0
    %111 = vmatpush.msra.mxu0 %v90
    %112 = vmatpush.msra.mxu0 %v89
    %113 = vmatpush.msra.mxu0 %v88
    %114 = vmatpush.msra.mxu0 %v87
    %115 = vmatmul.f32.gmra.mxu0 %v97
    %v116 = vpop.f32.mrf.mxu0
    %v117 = vadd.f32 %v93, %v116
    %118 = vdwg.mxu0
    %v119 = vmax.f32 %v117, 0.0
    %v120 = vld [vmem:[#allocation2] sm:$0xff]
    %v121 = vld [vmem:[#allocation2 + $0x8] sm:$0xff]
    %v122 = vld [vmem:[#allocation2 + $0x10] sm:$0xff]
    %v123 = vld [vmem:[#allocation2 + $0x18] sm:$0xff]
    %v124 = vld [vmem:[%s6] sm:$0x1]
    %v126 = vperm.slane %v124, 0
    %v129 = vsel %vm95, %v119, 0
    %131 = vmatpush.msra.mxu0 0.0
    %132 = vmatpush.msra.mxu0 0.0
    %133 = vmatpush.msra.mxu0 0.0
    %134 = vmatpush.msra.mxu0 0.0
    %135 = vmatpush.msra.mxu0 0.0
    %136 = vmatpush.msra.mxu0 0.0
    %137 = vmatpush.msra.mxu0 0.0
    %138 = vmatpush.msra.mxu0 0.0
    %139 = vmatpush.msra.mxu0 0.0
    %140 = vmatpush.msra.mxu0 0.0
    %141 = vmatpush.msra.mxu0 0.0
    %142 = vmatpush.msra.mxu0 0.0
    %143 = vmatpush.msra.mxu0 %v123
    %144 = vmatpush.msra.mxu0 %v122
    %145 = vmatpush.msra.mxu0 %v121
    %146 = vmatpush.msra.mxu0 %v120
    %147 = vmatmul.f32.gmra.mxu0 %v129
    %v148 = vpop.f32.mrf.mxu0
    %v149 = vadd.f32 %v126, %v148
    %150 = vdwg.mxu0
    %v151 = vmax.f32 %v149, 0.0
    %v152 = vld [vmem:[%s7] sm:$0xff]
    %v153 = vld [vmem:[%s7 + $0x8] sm:$0xff]
    %v154 = vld [vmem:[%s7 + $0x10] sm:$0xff]
    %v155 = vld [vmem:[%s7 + $0x18] sm:$0xff]
    %v156 = vld [vmem:[%s7 + $0x20] sm:$0xff]
    %v157 = vld [vmem:[%s7 + $0x28] sm:$0xff]
    %v158 = vld [vmem:[%s8] sm:$0x1]
    %v160 = vperm.slane %v158, 0
    %vm162 = vcmask 392192
    %v164 = vsel %vm162, %v151, 0
    %166 = vmatpush.msra.mxu0 0.0
    %167 = vmatpush.msra.mxu0 0.0
    %168 = vmatpush.msra.mxu0 0.0
    %169 = vmatpush.msra.mxu0 0.0
    %170 = vmatpush.msra.mxu0 0.0
    %171 = vmatpush.msra.mxu0 0.0
    %172 = vmatpush.msra.mxu0 0.0
    %173 = vmatpush.msra.mxu0 0.0
    %174 = vmatpush.msra.mxu0 0.0
    %175 = vmatpush.msra.mxu0 0.0
    %176 = vmatpush.msra.mxu0 %v157
    %177 = vmatpush.msra.mxu0 %v156
    %178 = vmatpush.msra.mxu0 %v155
    %179 = vmatpush.msra.mxu0 %v154
    %180 = vmatpush.msra.mxu0 %v153
    %181 = vmatpush.msra.mxu0 %v152
    %182 = vmatmul.f32.gmra.mxu0 %v164
    %v183 = vpop.f32.mrf.mxu0
    %v184 = vadd.f32 %v160, %v183
    %185 = vdwg.mxu0
    %186 = vst [vmem:[#allocation5] sm:$0xff] %v184
    // Predicated region
    $region42: #{tpu_custom_call.1} parent=1 // pred_check
      _
    $region43: #{tpu_custom_call.1} parent=1 // pred_check_branch
      %188 = sbr.rel (0) target = $region45
    $region44: #{tpu_custom_call.1} parent=1 // pred_region
      %190 = vsyncadd [#allocation4], 0
      %s192 = sshll.u32 [#allocation5], 4
      %s193 = int_to_ptr.vmem [resolvable:$true] %s192
      %s194 = sshll.u32 %s9, 4
      %s195 = int_to_ptr.hbm [resolvable:$true] %s194
      %197 = dma.vmem_to_hbm [thread:$0]  %s193, 128, %s195, [#allocation4]
    $region45: #{tpu_custom_call.1} parent=1 // pred_fallthru
      _
    // Predicated region
    $region46: #{tpu_custom_call.1} parent=1 // pred_check
      _
    $region47: #{tpu_custom_call.1} parent=1 // pred_check_branch
      %199 = sbr.rel (0) target = $region49
    $region48: #{tpu_custom_call.1} parent=1 // pred_region
      %201 = dma.done [#allocation4], 128
    $region49: #{tpu_custom_call.1} parent=1 // pred_fallthru
      _
    %202 = vsyncpa [#allocation3], 1
    %203 = vsyncpa [#allocation4], 1

// kernel: tpu_custom_call.1
$region0: #{tpu_custom_call.1}
  #allocation0 [shape = 'u32[]', space=smem, size = 0x4, offset = 0x4, fixed_abs, tag = 'smem constant byte address 0x4 - core index']
  #allocation1 [shape = 'u32[72,128]{1,0:T(1,128)}', space=vmem, size = 0x9000, scoped, tag = 'internal scratch']
  %s0 = inlined_call_operand.vmem [shape: f32[8,64], index: 0, kind: input, shape index: {}]
  %s1 = inlined_call_operand.vmem [shape: f32[64,32], index: 1, kind: input, shape index: {}]
  %s2 = inlined_call_operand.vmem [shape: f32[1,32], index: 2, kind: input, shape index: {}]
  %s3 = inlined_call_operand.vmem [shape: f32[32,32], index: 3, kind: input, shape index: {}]
  %s4 = inlined_call_operand.vmem [shape: f32[1,32], index: 4, kind: input, shape index: {}]
  %s5 = inlined_call_operand.hbm [shape: f32[32,48], index: 5, kind: input, shape index: {}]
  %s6 = inlined_call_operand.vmem [shape: f32[1,48], index: 6, kind: input, shape index: {}]
  %s7 = inlined_call_operand.vmem [shape: f32[48,128], index: 7, kind: input, shape index: {}]
  %s8 = inlined_call_operand.vmem [shape: f32[1,128], index: 8, kind: input, shape index: {}]
  %s9 = inlined_call_operand.hbm [shape: f32[8,128], index: 9, kind: output, shape index: {}]
  %s10 = sld [smem:[#allocation0]]
  $region50: #{tpu_custom_call.1} parent=0
    _
  %s12 = ssub.s32 1, %s10
  %s13 = scalar_select 0, %s12, %s10
  $region1: #{tpu_custom_call.1} parent=0
    #allocation2 [shape = 'u8[16384]{0}', space=vmem, size = 0x4000, scoped, tag = 'input window, operand 5, single buffered']
    #allocation3 [shape = 's32[1]{0}', space=sflag, size = 0x4, scoped, tag = 'scoped memory for tpu_custom_call.1']
    #allocation4 [shape = 's32[1]{0}', space=sflag, size = 0x4, scoped, tag = 'scoped memory for tpu_custom_call.1']
    #allocation5 [shape = 'u8[4096]{0}', space=vmem, size = 0x1000, scoped, tag = 'output window, operand 0, single buffered']
    %14 = vsyncpa [#allocation3], 0
    %15 = vsyncpa [#allocation4], 0
    // Predicated region
    $region2: #{tpu_custom_call.1} parent=1 // pred_check
      _
    $region3: #{tpu_custom_call.1} parent=1 // pred_check_branch
      %17 = sbr.rel (0) target = $region5
    $region4: #{tpu_custom_call.1} parent=1 // pred_region
      _
    $region5: #{tpu_custom_call.1} parent=1 // pred_fallthru
      _
    // Predicated region
    $region6: #{tpu_custom_call.1} parent=1 // pred_check
      _
    $region7: #{tpu_custom_call.1} parent=1 // pred_check_branch
      %19 = sbr.rel (0) target = $region9
    $region8: #{tpu_custom_call.1} parent=1 // pred_region
      _
    $region9: #{tpu_custom_call.1} parent=1 // pred_fallthru
      _
    // Predicated region
    $region10: #{tpu_custom_call.1} parent=1 // pred_check
      _
    $region11: #{tpu_custom_call.1} parent=1 // pred_check_branch
      %21 = sbr.rel (0) target = $region13
    $region12: #{tpu_custom_call.1} parent=1 // pred_region
      _
    $region13: #{tpu_custom_call.1} parent=1 // pred_fallthru
      _
    // Predicated region
    $region14: #{tpu_custom_call.1} parent=1 // pred_check
      _
    $region15: #{tpu_custom_call.1} parent=1 // pred_check_branch
      %23 = sbr.rel (0) target = $region17
    $region16: #{tpu_custom_call.1} parent=1 // pred_region
      _
    $region17: #{tpu_custom_call.1} parent=1 // pred_fallthru
      _
    // Predicated region
    $region18: #{tpu_custom_call.1} parent=1 // pred_check
      _
    $region19: #{tpu_custom_call.1} parent=1 // pred_check_branch
      %25 = sbr.rel (0) target = $region21
    $region20: #{tpu_custom_call.1} parent=1 // pred_region
      _
    $region21: #{tpu_custom_call.1} parent=1 // pred_fallthru
      _
    // Predicated region
    $region22: #{tpu_custom_call.1} parent=1 // pred_check
      _
    $region23: #{tpu_custom_call.1} parent=1 // pred_check_branch
      %27 = sbr.rel (0) target = $region25
    $region24: #{tpu_custom_call.1} parent=1 // pred_region
      %29 = vsyncadd [#allocation3], 0
      %s30 = sshll.u32 %s5, 4
      %s31 = int_to_ptr.hbm [resolvable:$true] %s30
      %s32 = sshll.u32 [#allocation2], 4
      %s33 = int_to_ptr.vmem [resolvable:$true] %s32
      %38 = dma.hbm_to_vmem [thread:$0]  %s31, 512, %s33, [#allocation3], 128, 128, 8
    $region25: #{tpu_custom_call.1} parent=1 // pred_fallthru
      _
    // Predicated region
    $region26: #{tpu_custom_call.1} parent=1 // pred_check
      _
    $region27: #{tpu_custom_call.1} parent=1 // pred_check_branch
      %40 = sbr.rel (0) target = $region29
    $region28: #{tpu_custom_call.1} parent=1 // pred_region
      _
    $region29: #{tpu_custom_call.1} parent=1 // pred_fallthru
      _
    // Predicated region
    $region30: #{tpu_custom_call.1} parent=1 // pred_check
      _
    $region31: #{tpu_custom_call.1} parent=1 // pred_check_branch
      %42 = sbr.rel (0) target = $region33
    $region32: #{tpu_custom_call.1} parent=1 // pred_region
      _
    $region33: #{tpu_custom_call.1} parent=1 // pred_fallthru
      _
    // Predicated region
    $region34: #{tpu_custom_call.1} parent=1 // pred_check
      _
    $region35: #{tpu_custom_call.1} parent=1 // pred_check_branch
      %44 = sbr.rel (0) target = $region37
    $region36: #{tpu_custom_call.1} parent=1 // pred_region
      _
    $region37: #{tpu_custom_call.1} parent=1 // pred_fallthru
      _
    // Predicated region
    $region38: #{tpu_custom_call.1} parent=1 // pred_check
      _
    $region39: #{tpu_custom_call.1} parent=1 // pred_check_branch
      %46 = sbr.rel (0) target = $region41
    $region40: #{tpu_custom_call.1} parent=1 // pred_region
      %48 = dma.done [#allocation3], 512
    $region41: #{tpu_custom_call.1} parent=1 // pred_fallthru
      _
    %v49 = vld [vmem:[%s0] sm:$0xff]
    %v50 = vld [vmem:[%s1] sm:$0xff]
    %v51 = vld [vmem:[%s1 + $0x8] sm:$0xff]
    %v52 = vld [vmem:[%s1 + $0x10] sm:$0xff]
    %v53 = vld [vmem:[%s1 + $0x18] sm:$0xff]
    %v54 = vld [vmem:[%s1 + $0x20] sm:$0xff]
    %v55 = vld [vmem:[%s1 + $0x28] sm:$0xff]
    %v56 = vld [vmem:[%s1 + $0x30] sm:$0xff]
    %v57 = vld [vmem:[%s1 + $0x38] sm:$0xff]
    %v58 = vld [vmem:[%s2] sm:$0x1]
    %v60 = vperm.slane %v58, 0
    %vm62 = vcmask 523264
    %v64 = vsel %vm62, %v49, 0
    %66 = vmatpush.msra.mxu0 0.0
    %67 = vmatpush.msra.mxu0 0.0
    %68 = vmatpush.msra.mxu0 0.0
    %69 = vmatpush.msra.mxu0 0.0
    %70 = vmatpush.msra.mxu0 0.0
    %71 = vmatpush.msra.mxu0 0.0
    %72 = vmatpush.msra.mxu0 0.0
    %73 = vmatpush.msra.mxu0 0.0
    %74 = vmatpush.msra.mxu0 %v57
    %75 = vmatpush.msra.mxu0 %v56
    %76 = vmatpush.msra.mxu0 %v55
    %77 = vmatpush.msra.mxu0 %v54
    %78 = vmatpush.msra.mxu0 %v53
    %79 = vmatpush.msra.mxu0 %v52
    %80 = vmatpush.msra.mxu0 %v51
    %81 = vmatpush.msra.mxu0 %v50
    %82 = vmatmul.f32.gmra.mxu0 %v64
    %v83 = vpop.f32.mrf.mxu0
    %v84 = vadd.f32 %v60, %v83
    %85 = vdwg.mxu0
    %v86 = vmax.f32 %v84, 0.0
    %v87 = vld [vmem:[%s3] sm:$0xff]
    %v88 = vld [vmem:[%s3 + $0x8] sm:$0xff]
    %v89 = vld [vmem:[%s3 + $0x10] sm:$0xff]
    %v90 = vld [vmem:[%s3 + $0x18] sm:$0xff]
    %v91 = vld [vmem:[%s4] sm:$0x1]
    %v93 = vperm.slane %v91, 0
    %vm95 = vcmask 261120
    %v97 = vsel %vm95, %v86, 0
    %99 = vmatpush.msra.mxu0 0.0
    %100 = vmatpush.msra.mxu0 0.0
    %101 = vmatpush.msra.mxu0 0.0
    %102 = vmatpush.msra.mxu0 0.0
    %103 = vmatpush.msra.mxu0 0.0
    %104 = vmatpush.msra.mxu0 0.0
    %105 = vmatpush.msra.mxu0 0.0
    %106 = vmatpush.msra.mxu0 0.0
    %107 = vmatpush.msra.mxu0 0.0
    %108 = vmatpush.msra.mxu0 0.0
    %109 = vmatpush.msra.mxu0 0.0
    %110 = vmatpush.msra.mxu0 0.0
    %111 = vmatpush.msra.mxu0 %v90
    %112 = vmatpush.msra.mxu0 %v89
    %113 = vmatpush.msra.mxu0 %v88
    %114 = vmatpush.msra.mxu0 %v87
    %115 = vmatmul.f32.gmra.mxu0 %v97
    %v116 = vpop.f32.mrf.mxu0
    %v117 = vadd.f32 %v93, %v116
    %118 = vdwg.mxu0
    %v119 = vmax.f32 %v117, 0.0
    %v120 = vld [vmem:[#allocation2] sm:$0xff]
    %v121 = vld [vmem:[#allocation2 + $0x8] sm:$0xff]
    %v122 = vld [vmem:[#allocation2 + $0x10] sm:$0xff]
    %v123 = vld [vmem:[#allocation2 + $0x18] sm:$0xff]
    %v124 = vld [vmem:[%s6] sm:$0x1]
    %v126 = vperm.slane %v124, 0
    %v129 = vsel %vm95, %v119, 0
    %131 = vmatpush.msra.mxu0 0.0
    %132 = vmatpush.msra.mxu0 0.0
    %133 = vmatpush.msra.mxu0 0.0
    %134 = vmatpush.msra.mxu0 0.0
    %135 = vmatpush.msra.mxu0 0.0
    %136 = vmatpush.msra.mxu0 0.0
    %137 = vmatpush.msra.mxu0 0.0
    %138 = vmatpush.msra.mxu0 0.0
    %139 = vmatpush.msra.mxu0 0.0
    %140 = vmatpush.msra.mxu0 0.0
    %141 = vmatpush.msra.mxu0 0.0
    %142 = vmatpush.msra.mxu0 0.0
    %143 = vmatpush.msra.mxu0 %v123
    %144 = vmatpush.msra.mxu0 %v122
    %145 = vmatpush.msra.mxu0 %v121
    %146 = vmatpush.msra.mxu0 %v120
    %147 = vmatmul.f32.gmra.mxu0 %v129
    %v148 = vpop.f32.mrf.mxu0
    %v149 = vadd.f32 %v126, %v148
    %150 = vdwg.mxu0
    %v151 = vmax.f32 %v149, 0.0
    %v152 = vld [vmem:[%s7] sm:$0xff]
    %v153 = vld [vmem:[%s7 + $0x8] sm:$0xff]
    %v154 = vld [vmem:[%s7 + $0x10] sm:$0xff]
    %v155 = vld [vmem:[%s7 + $0x18] sm:$0xff]
    %v156 = vld [vmem:[%s7 + $0x20] sm:$0xff]
    %v157 = vld [vmem:[%s7 + $0x28] sm:$0xff]
    %v158 = vld [vmem:[%s8] sm:$0x1]
    %v160 = vperm.slane %v158, 0
    %vm162 = vcmask 392192
    %v164 = vsel %vm162, %v151, 0
    %166 = vmatpush.msra.mxu0 0.0
    %167 = vmatpush.msra.mxu0 0.0
    %168 = vmatpush.msra.mxu0 0.0
    %169 = vmatpush.msra.mxu0 0.0
    %170 = vmatpush.msra.mxu0 0.0
    %171 = vmatpush.msra.mxu0 0.0
    %172 = vmatpush.msra.mxu0 0.0
    %173 = vmatpush.msra.mxu0 0.0
    %174 = vmatpush.msra.mxu0 0.0
    %175 = vmatpush.msra.mxu0 0.0
    %176 = vmatpush.msra.mxu0 %v157
    %177 = vmatpush.msra.mxu0 %v156
    %178 = vmatpush.msra.mxu0 %v155
    %179 = vmatpush.msra.mxu0 %v154
    %180 = vmatpush.msra.mxu0 %v153
    %181 = vmatpush.msra.mxu0 %v152
    %182 = vmatmul.f32.gmra.mxu0 %v164
    %v183 = vpop.f32.mrf.mxu0
    %v184 = vadd.f32 %v160, %v183
    %185 = vdwg.mxu0
    %186 = vst [vmem:[#allocation5] sm:$0xff] %v184
    // Predicated region
    $region42: #{tpu_custom_call.1} parent=1 // pred_check
      _
    $region43: #{tpu_custom_call.1} parent=1 // pred_check_branch
      %188 = sbr.rel (0) target = $region45
    $region44: #{tpu_custom_call.1} parent=1 // pred_region
      %190 = vsyncadd [#allocation4], 0
      %s192 = sshll.u32 [#allocation5], 4
      %s193 = int_to_ptr.vmem [resolvable:$true] %s192
      %s194 = sshll.u32 %s9, 4
      %s195 = int_to_ptr.hbm [resolvable:$true] %s194
      %197 = dma.vmem_to_hbm [thread:$0]  %s193, 128, %s195, [#allocation4]
    $region45: #{tpu_custom_call.1} parent=1 // pred_fallthru
      _
    // Predicated region
    $region46: #{tpu_custom_call.1} parent=1 // pred_check
      _
    $region47: #{tpu_custom_call.1} parent=1 // pred_check_branch
      %199 = sbr.rel (0) target = $region49
    $region48: #{tpu_custom_call.1} parent=1 // pred_region
      %201 = dma.done [#allocation4], 128
    $region49: #{tpu_custom_call.1} parent=1 // pred_fallthru
      _
    %202 = vsyncpa [#allocation3], 1
    %203 = vsyncpa [#allocation4], 1

</llo_original>
